<compile_context>
chip_gen: v7x
topology: tpu7x:2x2x1
jax: 0.10.0
libtpu: 0.0.40
codegen_flags: <defaults>
</compile_context>

<pallas_src>
import jax
import jax.numpy as jnp
from jax.experimental import pallas as pl
from jax.experimental.pallas import tpu as pltpu

EPS = 1e-5
VMEM_LIMIT_BYTES = 32 * 1024 * 1024          # safe on v5e/v6e/v7x
X_BLOCK_BUDGET_BYTES = 2 * 1024 * 1024       # per-buffer tile cap (v7x-friendly)


# --------------------------------------------------------------------------
# Tiling helper: pick (n_blk, c_blk, hw_tile) that divide (N, C, HW) evenly,
# keep the lane axis a multiple of 128 when possible, and keep one x block
# under the budget so BlockSpec double-buffering fits VMEM with headroom.
# --------------------------------------------------------------------------
def _pick_tiles(N, C, HW, itemsize, budget_bytes=X_BLOCK_BUDGET_BYTES):
    # Lane (last) axis: multiple of 128 -> dense, unmasked vst; otherwise the
    # (8,128) block rule forces the full extent.
    hw_tile = 128 if HW % 128 == 0 else HW
    # Sublane (channel) axis: multiple of 8, or the full extent.
    c_blk = 8 if C % 8 == 0 else C
    n_blk = 1

    def fits(nb, cb, ht):
        return nb * cb * ht * itemsize <= budget_bytes

    # Grow lane axis first (densest DMAs), then channels, then batch.
    if HW % 128 == 0:
        while HW % (hw_tile * 2) == 0 and fits(n_blk, c_blk, hw_tile * 2):
            hw_tile *= 2
    if C % 8 == 0:
        while C % (c_blk * 2) == 0 and fits(n_blk, c_blk * 2, hw_tile):
            c_blk *= 2
    while N % (n_blk * 2) == 0 and fits(n_blk * 2, c_blk, hw_tile):
        n_blk *= 2
    return n_blk, c_blk, hw_tile


# --------------------------------------------------------------------------
# Pass 1: fused per-channel sum / sum-of-squares -> (scale, shift).
# grid = (C/c_blk, N/n_blk, HW/hw_tile); axes 1,2 are the reduction.
# --------------------------------------------------------------------------
def _make_reduce_kernel(inv_count):
    def reduce_kernel(cond_ref, gamma_ref, beta_ref, x_ref, ss_ref, acc_ref):
        # cond_ref  : SMEM scalar-prefetch ref (consumed only by index_maps)
        # gamma_ref : (1, c_blk, 1) cond-selected gamma slice
        # beta_ref  : (1, c_blk, 1) cond-selected beta slice
        # x_ref     : (n_blk, c_blk, hw_tile)
        # ss_ref    : (c_blk, 2) output -> [:,0] = scale, [:,1] = shift
        # acc_ref   : (c_blk, 2) VMEM accumulator -> [:,0] = sum, [:,1] = sumsq
        del cond_ref
        nb = pl.program_id(1)
        t = pl.program_id(2)

        @pl.when((nb == 0) & (t == 0))
        def _init():
            acc_ref[...] = jnp.zeros_like(acc_ref)

        # Single pass over the tile: sum and sum-of-squares, f32 accumulation.
        # (For f32 inputs the astype is a no-op; for bf16 the convert fuses
        # into the reduction adds rather than materializing an upcast tile.)
        x = x_ref[...].astype(jnp.float32)            # (n_blk, c_blk, hw_tile)
        xs = jnp.sum(x, axis=0)                        # (c_blk, hw_tile)
        xq = jnp.sum(x * x, axis=0)                    # (c_blk, hw_tile)
        acc_ref[:, 0:1] = acc_ref[:, 0:1] + jnp.sum(xs, axis=1, keepdims=True)
        acc_ref[:, 1:2] = acc_ref[:, 1:2] + jnp.sum(xq, axis=1, keepdims=True)

        @pl.when((nb == pl.num_programs(1) - 1) & (t == pl.num_programs(2) - 1))
        def _finalize():
            sums = acc_ref[:, 0:1]                     # (c_blk, 1)
            sumsq = acc_ref[:, 1:2]
            mean = sums * inv_count
            # Biased variance; clamp guards the E[x^2]-mean^2 cancellation.
            var = jnp.maximum(sumsq * inv_count - mean * mean, 0.0)
            inv_std = jax.lax.rsqrt(var + EPS)
            gamma = gamma_ref[0]                       # (c_blk, 1)
            beta = beta_ref[0]
            scale = gamma * inv_std
            shift = beta - mean * scale
            ss_ref[:, 0:1] = scale
            ss_ref[:, 1:2] = shift

    return reduce_kernel


# --------------------------------------------------------------------------
# Pass 2: elementwise normalize, y = x * scale + shift.
# --------------------------------------------------------------------------
def _normalize_kernel(ss_ref, x_ref, o_ref):
    scale = ss_ref[:, 0:1]                             # (c_blk, 1) f32
    shift = ss_ref[:, 1:2]
    x = x_ref[...]                                     # (n_blk, c_blk, hw_tile)
    y = x.astype(jnp.float32) * scale[None, :, :] + shift[None, :, :]
    o_ref[...] = y.astype(o_ref.dtype)


# --------------------------------------------------------------------------
# Wrapper
# --------------------------------------------------------------------------
def cond_batch_norm_2d(x_nchw, cond, gammas, betas):
    """x_nchw: (N, C, H, W); cond: int; gammas/betas: (num_conds, C)."""
    N, C, H, W = x_nchw.shape
    num_conds = gammas.shape[0]
    HW = H * W

    # Free, contiguous reshape -- no transpose, H*W lands on the lane axis.
    x3 = x_nchw.reshape(N, C, HW)
    gammas3 = gammas.reshape(num_conds, C, 1).astype(jnp.float32)
    betas3 = betas.reshape(num_conds, C, 1).astype(jnp.float32)
    cond_arr = jnp.asarray(cond, dtype=jnp.int32).reshape((1,))

    n_blk, c_blk, hw_tile = _pick_tiles(N, C, HW, jnp.dtype(x_nchw.dtype).itemsize)
    grid = (C // c_blk, N // n_blk, HW // hw_tile)
    inv_count = 1.0 / float(N * HW)

    # ---- pass 1: per-channel scale/shift ---------------------------------
    scale_shift = pl.pallas_call(
        _make_reduce_kernel(inv_count),
        out_shape=jax.ShapeDtypeStruct((C, 2), jnp.float32),
        grid_spec=pltpu.PrefetchScalarGridSpec(
            num_scalar_prefetch=1,        # cond lands in SMEM, feeds index_maps
            grid=grid,
            in_specs=[
                pl.BlockSpec((1, c_blk, 1),
                             lambda cb, nb, t, cond_ref: (cond_ref[0], cb, 0)),
                pl.BlockSpec((1, c_blk, 1),
                             lambda cb, nb, t, cond_ref: (cond_ref[0], cb, 0)),
                pl.BlockSpec((n_blk, c_blk, hw_tile),
                             lambda cb, nb, t, cond_ref: (nb, cb, t)),
            ],
            out_specs=pl.BlockSpec((c_blk, 2),
                                   lambda cb, nb, t, cond_ref: (cb, 0)),
            scratch_shapes=[pltpu.VMEM((c_blk, 2), jnp.float32)],
        ),
        compiler_params=pltpu.CompilerParams(
            dimension_semantics=("parallel", "arbitrary", "arbitrary"),
            vmem_limit_bytes=VMEM_LIMIT_BYTES),
    )(cond_arr, gammas3, betas3, x3)

    # ---- pass 2: normalize (fully parallel, pipelined, lane-dense) -------
    out3 = pl.pallas_call(
        _normalize_kernel,
        out_shape=jax.ShapeDtypeStruct((N, C, HW), x_nchw.dtype),
        grid_spec=pltpu.PrefetchScalarGridSpec(
            num_scalar_prefetch=0,
            grid=grid,
            in_specs=[
                pl.BlockSpec((c_blk, 2), lambda cb, nb, t: (cb, 0)),
                pl.BlockSpec((n_blk, c_blk, hw_tile), lambda cb, nb, t: (nb, cb, t)),
            ],
            out_specs=pl.BlockSpec((n_blk, c_blk, hw_tile),
                                   lambda cb, nb, t: (nb, cb, t)),
        ),
        compiler_params=pltpu.CompilerParams(
            dimension_semantics=("parallel", "parallel", "parallel"),
            vmem_limit_bytes=VMEM_LIMIT_BYTES),
    )(scale_shift, x3)

    return out3.reshape(N, C, H, W)


# --------------------------------------------------------------------------
# Reference (training-mode BatchNorm2d forward)
# --------------------------------------------------------------------------
def _reference_bn(x_nchw, gamma, beta):
    mean = jnp.mean(x_nchw, axis=(0, 2, 3), keepdims=True)
    var = jnp.var(x_nchw, axis=(0, 2, 3), keepdims=True)   # biased, matches BN
    xhat = (x_nchw - mean) / jnp.sqrt(var + EPS)
    return xhat * gamma.reshape(1, -1, 1, 1) + beta.reshape(1, -1, 1, 1)


if __name__ == "__main__":
    num_features = 4
    num_conds = 2
    N, C, H, W = 2, num_features, 16, 16

    key = jax.random.PRNGKey(0)
    x = jax.random.normal(key, (N, C, H, W), dtype=jnp.float32)

    # The PyTorch module shares ONE BatchNorm2d instance across all conds, so
    # every cond row holds identical parameters; use non-trivial (but shared)
    # values so the affine path is actually exercised.
    gamma_row = 1.0 + 0.1 * jnp.arange(num_features, dtype=jnp.float32)
    beta_row = 0.05 * jnp.arange(num_features, dtype=jnp.float32)
    gammas = jnp.tile(gamma_row[None, :], (num_conds, 1))
    betas = jnp.tile(beta_row[None, :], (num_conds, 1))

    cond = 1
    out = cond_batch_norm_2d(x, cond, gammas, betas)
    out = jax.block_until_ready(out)

    ref = _reference_bn(x, gammas[cond], betas[cond])
    assert out.shape == (N, C, H, W)
    assert jnp.allclose(out, ref, atol=1e-4, rtol=1e-4), "mismatch vs reference"

    print("KERNEL_OK")
</pallas_src>

<mosaic_0001>
module attributes {stable_mosaic.version = 11 : i64} {
  func.func @reduce_kernel(%arg0: i32, %arg1: i32, %arg2: i32, %arg3: memref<1xi32, #tpu.memory_space<smem>>, %arg4: memref<1x4x1xf32, #tpu.memory_space<vmem>>, %arg5: memref<1x4x1xf32, #tpu.memory_space<vmem>>, %arg6: memref<2x4x256xf32, #tpu.memory_space<vmem>>, %arg7: memref<4x2xf32, #tpu.memory_space<vmem>>, %arg8: memref<4x2xf32, #tpu.memory_space<vmem>>) attributes {dimension_semantics = [#tpu.dimension_semantics<parallel>, #tpu.dimension_semantics<arbitrary>, #tpu.dimension_semantics<arbitrary>], iteration_bounds = array<i64: 1, 1, 1>, scalar_prefetch = 1 : i64, scratch_operands = 1 : i64, tpu.core_type = #tpu.core_type<tc>, window_params = [{transform_indices = @transform_0, window_bounds = array<i64: 1, 4, 1>}, {transform_indices = @transform_1, window_bounds = array<i64: 1, 4, 1>}, {transform_indices = @transform_2, window_bounds = array<i64: 2, 4, 256>}, {transform_indices = @transform_3, window_bounds = array<i64: 4, 2>}]} {
    %c0_i32 = arith.constant 0 : i32
    %0 = arith.cmpi eq, %arg1, %c0_i32 : i32
    %c0_i32_0 = arith.constant 0 : i32
    %1 = arith.cmpi eq, %arg2, %c0_i32_0 : i32
    %2 = arith.andi %0, %1 : i1
    %3 = arith.extui %2 : i1 to i32
    %c0_i32_1 = arith.constant 0 : i32
    %4 = arith.cmpi ne, %3, %c0_i32_1 : i32
    scf.if %4 {
      %cst_17 = arith.constant 0.000000e+00 : f32
      %24 = vector.broadcast %cst_17 : f32 to vector<4x2xf32>
      %c0_18 = arith.constant 0 : index
      %c0_19 = arith.constant 0 : index
      %25 = vector.load %arg8[%c0_18, %c0_19] : memref<4x2xf32, #tpu.memory_space<vmem>>, vector<4x2xf32>
      tpu.vector_store %arg8[%c0_18, %c0_19], %24 {strides = array<i32>} : memref<4x2xf32, #tpu.memory_space<vmem>>, vector<4x2xf32>,
    } else {
    }
    %c0 = arith.constant 0 : index
    %c0_2 = arith.constant 0 : index
    %c0_3 = arith.constant 0 : index
    %5 = vector.load %arg6[%c0, %c0_2, %c0_3] : memref<2x4x256xf32, #tpu.memory_space<vmem>>, vector<2x4x256xf32>
    %cst = arith.constant dense<0.000000e+00> : vector<4x256xf32>
    %6 = vector.multi_reduction <add>, %5, %cst [0] : vector<2x4x256xf32> to vector<4x256xf32>
    %7 = arith.mulf %5, %5 : vector<2x4x256xf32>
    %cst_4 = arith.constant dense<0.000000e+00> : vector<4x256xf32>
    %8 = vector.multi_reduction <add>, %7, %cst_4 [0] : vector<2x4x256xf32> to vector<4x256xf32>
    %c0_5 = arith.constant 0 : index
    %c0_6 = arith.constant 0 : index
    %9 = vector.load %arg8[%c0_5, %c0_6] : memref<4x2xf32, #tpu.memory_space<vmem>>, vector<4x1xf32>
    %cst_7 = arith.constant dense<0.000000e+00> : vector<4xf32>
    %10 = vector.multi_reduction <add>, %6, %cst_7 [1] : vector<4x256xf32> to vector<4xf32>
    %11 = vector.shape_cast %10 : vector<4xf32> to vector<4x1xf32>
    %12 = arith.addf %9, %11 : vector<4x1xf32>
    %c0_8 = arith.constant 0 : index
    %c0_9 = arith.constant 0 : index
    %13 = vector.load %arg8[%c0_8, %c0_9] : memref<4x2xf32, #tpu.memory_space<vmem>>, vector<4x1xf32>
    tpu.vector_store %arg8[%c0_8, %c0_9], %12 {strides = array<i32>} : memref<4x2xf32, #tpu.memory_space<vmem>>, vector<4x1xf32>,
    %c0_10 = arith.constant 0 : index
    %c1 = arith.constant 1 : index
    %14 = vector.load %arg8[%c0_10, %c1] : memref<4x2xf32, #tpu.memory_space<vmem>>, vector<4x1xf32>
    %cst_11 = arith.constant dense<0.000000e+00> : vector<4xf32>
    %15 = vector.multi_reduction <add>, %8, %cst_11 [1] : vector<4x256xf32> to vector<4xf32>
    %16 = vector.shape_cast %15 : vector<4xf32> to vector<4x1xf32>
    %17 = arith.addf %14, %16 : vector<4x1xf32>
    %c0_12 = arith.constant 0 : index
    %c1_13 = arith.constant 1 : index
    %18 = vector.load %arg8[%c0_12, %c1_13] : memref<4x2xf32, #tpu.memory_space<vmem>>, vector<4x1xf32>
    tpu.vector_store %arg8[%c0_12, %c1_13], %17 {strides = array<i32>} : memref<4x2xf32, #tpu.memory_space<vmem>>, vector<4x1xf32>,
    %c0_i32_14 = arith.constant 0 : i32
    %19 = arith.cmpi eq, %arg1, %c0_i32_14 : i32
    %c0_i32_15 = arith.constant 0 : i32
    %20 = arith.cmpi eq, %arg2, %c0_i32_15 : i32
    %21 = arith.andi %19, %20 : i1
    %22 = arith.extui %21 : i1 to i32
    %c0_i32_16 = arith.constant 0 : i32
    %23 = arith.cmpi ne, %22, %c0_i32_16 : i32
    scf.if %23 {
      %c0_17 = arith.constant 0 : index
      %c0_18 = arith.constant 0 : index
      %24 = vector.load %arg8[%c0_17, %c0_18] : memref<4x2xf32, #tpu.memory_space<vmem>>, vector<4x1xf32>
      %c0_19 = arith.constant 0 : index
      %c1_20 = arith.constant 1 : index
      %25 = vector.load %arg8[%c0_19, %c1_20] : memref<4x2xf32, #tpu.memory_space<vmem>>, vector<4x1xf32>
      %cst_21 = arith.constant 0.001953125 : f32
      %26 = vector.broadcast %cst_21 : f32 to vector<4x1xf32>
      %27 = arith.mulf %24, %26 : vector<4x1xf32>
      %cst_22 = arith.constant 0.001953125 : f32
      %28 = vector.broadcast %cst_22 : f32 to vector<4x1xf32>
      %29 = arith.mulf %25, %28 : vector<4x1xf32>
      %30 = arith.mulf %27, %27 : vector<4x1xf32>
      %31 = arith.subf %29, %30 : vector<4x1xf32>
      %cst_23 = arith.constant 0.000000e+00 : f32
      %32 = vector.broadcast %cst_23 : f32 to vector<4x1xf32>
      %33 = arith.maximumf %31, %32 : vector<4x1xf32>
      %cst_24 = arith.constant 9.99999974E-6 : f32
      %34 = vector.broadcast %cst_24 : f32 to vector<4x1xf32>
      %35 = arith.addf %33, %34 : vector<4x1xf32>
      %36 = math.rsqrt %35 : vector<4x1xf32>
      %c0_25 = arith.constant 0 : index
      %c0_26 = arith.constant 0 : index
      %c0_27 = arith.constant 0 : index
      %37 = vector.load %arg4[%c0_25, %c0_26, %c0_27] : memref<1x4x1xf32, #tpu.memory_space<vmem>>, vector<1x4x1xf32>
      %38 = vector.shape_cast %37 : vector<1x4x1xf32> to vector<4x1xf32>
      %c0_28 = arith.constant 0 : index
      %c0_29 = arith.constant 0 : index
      %c0_30 = arith.constant 0 : index
      %39 = vector.load %arg5[%c0_28, %c0_29, %c0_30] : memref<1x4x1xf32, #tpu.memory_space<vmem>>, vector<1x4x1xf32>
      %40 = vector.shape_cast %39 : vector<1x4x1xf32> to vector<4x1xf32>
      %41 = arith.mulf %38, %36 : vector<4x1xf32>
      %42 = arith.mulf %27, %41 : vector<4x1xf32>
      %43 = arith.subf %40, %42 : vector<4x1xf32>
      %c0_31 = arith.constant 0 : index
      %c0_32 = arith.constant 0 : index
      %44 = vector.load %arg7[%c0_31, %c0_32] : memref<4x2xf32, #tpu.memory_space<vmem>>, vector<4x1xf32>
      tpu.vector_store %arg7[%c0_31, %c0_32], %41 {strides = array<i32>} : memref<4x2xf32, #tpu.memory_space<vmem>>, vector<4x1xf32>,
      %c0_33 = arith.constant 0 : index
      %c1_34 = arith.constant 1 : index
      %45 = vector.load %arg7[%c0_33, %c1_34] : memref<4x2xf32, #tpu.memory_space<vmem>>, vector<4x1xf32>
      tpu.vector_store %arg7[%c0_33, %c1_34], %43 {strides = array<i32>} : memref<4x2xf32, #tpu.memory_space<vmem>>, vector<4x1xf32>,
    } else {
    }
    return
  }
  func.func @transform_0(%arg0: i32, %arg1: i32, %arg2: i32, %arg3: memref<1xi32, #tpu.memory_space<smem>>) -> (i32, i32, i32) {
    %c0 = arith.constant 0 : index
    %0 = memref.load %arg3[%c0] : memref<1xi32, #tpu.memory_space<smem>>
    %c0_i32 = arith.constant 0 : i32
    %c0_i32_0 = arith.constant 0 : i32
    return %0, %arg0, %c0_i32 : i32, i32, i32
  }
  func.func @transform_1(%arg0: i32, %arg1: i32, %arg2: i32, %arg3: memref<1xi32, #tpu.memory_space<smem>>) -> (i32, i32, i32) {
    %c0 = arith.constant 0 : index
    %0 = memref.load %arg3[%c0] : memref<1xi32, #tpu.memory_space<smem>>
    %c0_i32 = arith.constant 0 : i32
    %c0_i32_0 = arith.constant 0 : i32
    return %0, %arg0, %c0_i32 : i32, i32, i32
  }
  func.func @transform_2(%arg0: i32, %arg1: i32, %arg2: i32, %arg3: memref<1xi32, #tpu.memory_space<smem>>) -> (i32, i32, i32) {
    %c0_i32 = arith.constant 0 : i32
    return %arg1, %arg0, %arg2 : i32, i32, i32
  }
  func.func @transform_3(%arg0: i32, %arg1: i32, %arg2: i32, %arg3: memref<1xi32, #tpu.memory_space<smem>>) -> (i32, i32) {
    %c0_i32 = arith.constant 0 : i32
    %c0_i32_0 = arith.constant 0 : i32
    return %arg0, %c0_i32 : i32, i32
  }
}

</mosaic_0001>

<llo_original>
// kernel: tpu_custom_call.1
$region0: #{tpu_custom_call.1}
  #allocation0 [shape = 'u32[]', space=smem, size = 0x4, offset = 0x4, fixed_abs, tag = 'smem constant byte address 0x4 - core index']
  #allocation1 [shape = 'u32[144,128]{1,0:T(1,128)}', space=vmem, size = 0x12000, scoped, tag = 'internal scratch']
  #allocation2 [shape = 'f32[4,2]{1,0:T(4,128)}', space=vmem, size = 0x800, scoped, tag = 'scratch operand']
  #allocation3 [shape = 's32[1]{0}', space=sflag, size = 0x4, scoped, tag = 'scoped memory for tpu_custom_call.1']
  #allocation4 [shape = 's32[1]{0:T(128)S(6)}', space=smem, size = 0x200, scoped, tag = 'prefetched SMEM operand 0']
  %s0 = inlined_call_operand.<no memory space> [shape: s32[1], index: 0, kind: input, shape index: {}]
  %s1 = inlined_call_operand.vmem [shape: f32[2,4,1], index: 1, kind: input, shape index: {}]
  %s2 = inlined_call_operand.vmem [shape: f32[2,4,1], index: 2, kind: input, shape index: {}]
  %s3 = inlined_call_operand.vmem [shape: f32[2,4,256], index: 3, kind: input, shape index: {}]
  %s4 = inlined_call_operand.vmem [shape: f32[4,2], index: 4, kind: output, shape index: {}]
  %s5 = sld [smem:[#allocation0]]
  $region30: #{tpu_custom_call.1} parent=0
    _
  %s7 = ssub.s32 1, %s5
  %s8 = scalar_select 0, %s7, %s5
  %9 = sst [smem:[#allocation4]] %s0
  // Predicated region
  $region2: #{tpu_custom_call.1} parent=0 // pred_check
    _
  $region3: #{tpu_custom_call.1} parent=0 // pred_check_branch
    %11 = sbr.rel (0) target = $region5
  $region4: #{tpu_custom_call.1} parent=0 // pred_region
    %s12 = sld [smem:[#allocation4]]
    %p13 = scmp.lt.s32.totalorder %s12, 1
    %s14 = scalar_select %p13, %s12, 1
    %s15 = smul.addr %s14, 4
    %s16 = scalar_lea.vmem %s1, %s15
    %s17 = sld [smem:[#allocation4]]
  $region5: #{tpu_custom_call.1} parent=0 // pred_fallthru
    _
  // Predicated region
  $region6: #{tpu_custom_call.1} parent=0 // pred_check
    _
  $region7: #{tpu_custom_call.1} parent=0 // pred_check_branch
    %19 = sbr.rel (0) target = $region9
  $region8: #{tpu_custom_call.1} parent=0 // pred_region
    %s20 = sld [smem:[#allocation4]]
    %p21 = scmp.lt.s32.totalorder %s20, 1
    %s22 = scalar_select %p21, %s20, 1
    %s23 = smul.addr %s22, 4
    %s24 = scalar_lea.vmem %s2, %s23
    %s25 = sld [smem:[#allocation4]]
  $region9: #{tpu_custom_call.1} parent=0 // pred_fallthru
    _
  // Predicated region
  $region10: #{tpu_custom_call.1} parent=0 // pred_check
    _
  $region11: #{tpu_custom_call.1} parent=0 // pred_check_branch
    %27 = sbr.rel (0) target = $region13
  $region12: #{tpu_custom_call.1} parent=0 // pred_region
    _
  $region13: #{tpu_custom_call.1} parent=0 // pred_fallthru
    _
  %s28 = sld [smem:[#allocation4]]
  %p29 = scmp.lt.s32.totalorder %s28, 1
  %s30 = scalar_select %p29, %s28, 1
  %s31 = smul.addr %s30, 4
  %s32 = scalar_lea.vmem %s1, %s31
  %s33 = sld [smem:[#allocation4]]
  %p34 = scmp.lt.s32.totalorder %s33, 1
  %s35 = scalar_select %p34, %s33, 1
  %s36 = smul.addr %s35, 4
  %s37 = scalar_lea.vmem %s2, %s36
  %s38 = sld [smem:[#allocation4]]
  %p39 = scmp.lt.s32.totalorder %s38, 1
  %s40 = scalar_select %p39, %s38, 1
  %s41 = smul.addr %s40, 4
  %s42 = scalar_lea.vmem %s1, %s41
  %s43 = sld [smem:[#allocation4]]
  %s44 = sld [smem:[#allocation4]]
  %p45 = scmp.lt.s32.totalorder %s44, 1
  %s46 = scalar_select %p45, %s44, 1
  %s47 = smul.addr %s46, 4
  %s48 = scalar_lea.vmem %s2, %s47
  %s49 = sld [smem:[#allocation4]]
  %p50 = scmp.eq.s32.totalorder 0, 0
  %p51 = scmp.eq.s32.totalorder 0, 0
  %p52 = pnand %p50, %p51
  %p53 = pneg %p52
  // Predicated region
  $region14: #{tpu_custom_call.1} parent=0 // pred_check
    _
  $region15: #{tpu_custom_call.1} parent=0 // pred_check_branch
    %55 = sbr.rel (%p52) target = $region17
  $region16: #{tpu_custom_call.1} parent=0 // pred_region
    %vm56 = vcmask 11264
    %57 = vst.msk [vmem:[#allocation2] sm:$0xf] %vm56, 0.0
  $region17: #{tpu_custom_call.1} parent=0 // pred_fallthru
    _
  %v58 = vld [vmem:[%s3] sm:$0xff]
  %v59 = vld [vmem:[%s3 + $0x8] sm:$0xff]
  %v62 = vcombine.high %v58, %v58
  %v63 = vcombine.high %v59, %v59
  %vm66 = vcmask 1043456
  %v67 = vsel %vm66, %v58, 0.0
  %v68 = vsel %vm66, %v59, 0.0
  %v69 = vadd.f32 %v67, %v68
  %v70 = vsel %vm66, %v62, 0.0
  %v71 = vsel %vm66, %v63, 0.0
  %v72 = vadd.f32 %v70, %v71
  %v73 = vmul.f32 %v58, %v58
  %v74 = vmul.f32 %v59, %v59
  %v77 = vcombine.high %v73, %v73
  %v78 = vcombine.high %v74, %v74
  %v81 = vsel %vm66, %v73, 0.0
  %v82 = vsel %vm66, %v74, 0.0
  %v83 = vadd.f32 %v81, %v82
  %v84 = vsel %vm66, %v77, 0.0
  %v85 = vsel %vm66, %v78, 0.0
  %v86 = vadd.f32 %v84, %v85
  %v87 = vld [vmem:[#allocation2] sm:$0xf]
  %v88 = vsel %vm66, %v69, 0.0
  %v89 = vsel %vm66, %v72, 0.0
  %v90 = vadd.f32 %v88, %v89
  %91 = vadd.xlane.f32.xlu0 %v90
  %v92 = vpop.xlane.xlu0 %91
  %v93 = vadd.f32 %v87, %v92
  %vm94 = vcmask 3072
  %95 = vst.msk [vmem:[#allocation2] sm:$0xf] %vm94, %v93
  %v96 = vld [vmem:[#allocation2] sm:$0xf]
  %v97 = vsel %vm66, %v83, 0.0
  %v98 = vsel %vm66, %v86, 0.0
  %v99 = vadd.f32 %v97, %v98
  %100 = vadd.xlane.f32.xlu0 %v99
  %v101 = vpop.xlane.xlu0 %100
  %v102 = vadd.f32 %v96, %v101
  %vm103 = vcmask 11272
  %104 = vst.msk [vmem:[#allocation2] sm:$0xf] %vm103, %v102
  // Predicated region
  $region18: #{tpu_custom_call.1} parent=0 // pred_check
    _
  $region19: #{tpu_custom_call.1} parent=0 // pred_check_branch
    %106 = sbr.rel (%p52) target = $region21
  $region20: #{tpu_custom_call.1} parent=0 // pred_region
    %v107 = vld [vmem:[#allocation2] sm:$0xf]
    %v108 = vmul.f32 %v107, 0.001953125
    %v109 = vmul.f32 %v108, %v108
    %111 = vrot.lane.b32.xlu0 %v109, 1
    %v112 = vpop.permute.xlu0 %111
    %v114 = vsub.f32 %v108, %v112
    %v115 = vmax.f32 %v114, 0.0
    %v116 = vadd.f32 %v115, 1e-05
    %v117 = vrsqrt.pop %v116
    %v118 = vld [vmem:[%s42] sm:$0xf]
    %v119 = vld [vmem:[%s48] sm:$0xf]
    %121 = vrot.lane.b32.xlu0 %v117, 127
    %v122 = vpop.permute.xlu0 %121
    %v124 = vmul.f32 %v118, %v122
    %v125 = vmul.f32 %v108, %v124
    %v126 = vsub.f32 %v119, %v125
    %127 = vst.msk [vmem:[%s4] sm:$0xf] %vm94, %v124
    %129 = vrot.lane.b32.xlu0 %v126, 1
    %v130 = vpop.permute.xlu0 %129
    %132 = vst.msk [vmem:[%s4] sm:$0xf] %vm103, %v130
  $region21: #{tpu_custom_call.1} parent=0 // pred_fallthru
    _
  // Predicated region
  $region22: #{tpu_custom_call.1} parent=0 // pred_check
    _
  $region23: #{tpu_custom_call.1} parent=0 // pred_check_branch
    %134 = sbr.rel (0) target = $region25
  $region24: #{tpu_custom_call.1} parent=0 // pred_region
    _
  $region25: #{tpu_custom_call.1} parent=0 // pred_fallthru
    _
  // Predicated region
  $region26: #{tpu_custom_call.1} parent=0 // pred_check
    _
  $region27: #{tpu_custom_call.1} parent=0 // pred_check_branch
    %136 = sbr.rel (0) target = $region29
  $region28: #{tpu_custom_call.1} parent=0 // pred_region
    _
  $region29: #{tpu_custom_call.1} parent=0 // pred_fallthru
    _

</llo_original>
